<compile_context>
chip_gen: v7x
topology: tpu7x:2x2x1
jax: 0.10.0
libtpu: 0.0.40
codegen_flags: <defaults>
</compile_context>

<pallas_src>
import functools

import jax
import jax.numpy as jnp
from jax.experimental import pallas as pl
from jax.experimental.pallas import tpu as pltpu

# Finite "minus infinity" so the running-rescale exp() never sees inf - inf.
_NEG_BIG = float(jnp.finfo(jnp.float32).min)

# Per-step input block budget.  The BlockSpec pipeline double-buffers the
# input, so real VMEM use is ~2x this (+ tiny scratch/output); 8 MiB total fits
# every generation's scoped-VMEM default while the ~3-5 us of DMA per step
# amortizes the ~0.35 us grid-step overhead.
_TARGET_BLOCK_BYTES = 4 * 1024 * 1024
_VMEM_LIMIT_BYTES = 32 * 1024 * 1024   # >= scoped default on v5e/v6e/v7x


def _round_up(x, m):
    return ((x + m - 1) // m) * m


# ----------------------------------------------------------------------------
# Kernel: per-row streaming logsumexp over the lane (last) axis.
#   input  x: (R, N)   rows = flattened (batch, channel [, lane-split])
#   output lse: (R, 1)
# Grid = (row tiles [parallel], lane tiles [arbitrary, innermost reduction]).
# ----------------------------------------------------------------------------
def _row_lse_kernel(x_ref, lse_ref, m_sc, s_sc, *, n_valid, tn, need_mask):
    j = pl.program_id(1)
    nj = pl.num_programs(1)

    @pl.when(j == 0)
    def _():
        m_sc[...] = jnp.full_like(m_sc, _NEG_BIG)
        s_sc[...] = jnp.zeros_like(s_sc)

    def update(x_f32):
        m_prev = m_sc[...]
        m_new = jnp.maximum(m_prev, x_f32.max(axis=1, keepdims=True))
        s_sc[...] = s_sc[...] * jnp.exp(m_prev - m_new) + \
                    jnp.exp(x_f32 - m_new).sum(axis=1, keepdims=True)
        m_sc[...] = m_new

    if need_mask:
        # Only the ragged last lane tile pays the iota/compare/select.
        @pl.when(j < nj - 1)
        def _():
            update(x_ref[...].astype(jnp.float32))

        @pl.when(j == nj - 1)
        def _():
            x = x_ref[...].astype(jnp.float32)
            col = j * tn + jax.lax.broadcasted_iota(jnp.int32, x.shape, 1)
            update(jnp.where(col < n_valid, x, _NEG_BIG))
    else:
        update(x_ref[...].astype(jnp.float32))

    @pl.when(j == nj - 1)
    def _():
        lse_ref[...] = m_sc[...] + jnp.log(s_sc[...])


def _per_row_logsumexp(x2d):
    """x2d: (R, N) -> (R,) float32 logsumexp over axis 1 via a Pallas kernel."""
    R, N = x2d.shape
    elem_bytes = jnp.dtype(x2d.dtype).itemsize
    # Sublane quantum: 8 for 32-bit, 16 for bf16/f16, 32 for 8-bit.
    sub = max(8, 32 // elem_bytes)

    # Lane tile: as big as the block budget allows at the minimum row tile.
    # Multiple of 128, or the full row when it fits in one tile (no mask then).
    max_lanes = max(128, (_TARGET_BLOCK_BYTES // (sub * elem_bytes)) // 128 * 128)
    if N <= max_lanes:
        TN = N                         # single lane tile; full dim is always legal
    else:
        TN = max_lanes
    lane_grid = pl.cdiv(N, TN)
    need_mask = (N % TN) != 0

    # Row tile: fill the remaining block budget, multiple of `sub`, never
    # exceeding R (a ragged last row tile is fine: OOB reads are garbage rows
    # that stay in their own rows, OOB writes are masked).
    rows_budget = max(sub, (_TARGET_BLOCK_BYTES // (TN * elem_bytes)) // sub * sub)
    if R < sub:
        TR = R                          # full dim
    elif R % sub == 0:
        TR = min(R, rows_budget)
    else:
        TR = min((R // sub) * sub, rows_budget)
    # Keep >= 2 row tiles when rows allow it, so the "parallel" axis can feed
    # both v7x TensorCores.
    if R >= 2 * sub:
        TR = min(TR, max(sub, (pl.cdiv(R, 2) // sub) * sub))
    row_grid = pl.cdiv(R, TR)

    cost = pl.CostEstimate(
        flops=3 * R * N,                 # max + sub + add per element (rough)
        transcendentals=R * N,           # one exp per element
        bytes_accessed=R * N * elem_bytes + R * 4,
    )

    lse = pl.pallas_call(
        functools.partial(_row_lse_kernel, n_valid=N, tn=TN, need_mask=need_mask),
        out_shape=jax.ShapeDtypeStruct((R, 1), jnp.float32),
        grid_spec=pltpu.PrefetchScalarGridSpec(
            num_scalar_prefetch=0,
            grid=(row_grid, lane_grid),
            in_specs=[pl.BlockSpec((TR, TN), lambda i, j: (i, j))],
            out_specs=pl.BlockSpec((TR, 1), lambda i, j: (i, 0)),
            scratch_shapes=[
                pltpu.VMEM((TR, 1), jnp.float32),   # running max
                pltpu.VMEM((TR, 1), jnp.float32),   # running rescaled sum
            ],
        ),
        compiler_params=pltpu.CompilerParams(
            dimension_semantics=("parallel", "arbitrary"),
            vmem_limit_bytes=_VMEM_LIMIT_BYTES),
        cost_estimate=cost,
    )(x2d)
    return lse[:, 0]


def _channel_logsumexp(predictions):
    """predictions: (B, C, W, H) -> (C,) logsumexp over (B, W, H), f32."""
    B, C, W, H = predictions.shape
    R, N = B * C, W * H

    # Split the lane axis (free, row-major reshape) when B*C is small so the
    # parallel row axis of the kernel grid has >= 2 steps (v7x dual-TC).  The
    # split partial LSEs are combined exactly below (logsumexp associativity).
    S = 1
    while (R * S < 16) and (N % (2 * S) == 0) and (N // (2 * S) >= 256):
        S *= 2

    x2d = predictions.reshape(R * S, N // S)          # no transpose, no copy
    row_lse = _per_row_logsumexp(x2d).reshape(B, C, S)
    return jax.scipy.special.logsumexp(row_lse, axis=(0, 2))   # (C,)


# ----------------------------------------------------------------------------
# Wrapper matching MaximumLikelihoodLoss.forward
# ----------------------------------------------------------------------------
def maximum_likelihood_loss(predictions, targets):
    """predictions: (B, C, W, H) float.  targets: list of dicts per batch item
    with 'coordinates' (K_b, 2) int and (if C > 1) 'labels' (K_b,) int > 0."""
    B, C, W, H = predictions.shape

    # Hot path: one streaming pass over `predictions` inside the Pallas kernel.
    lse = _channel_logsumexp(predictions)             # (C,) float32

    # Tiny data-dependent keypoint gather + mean stays in plain JAX glue.
    # TODO(synk): ragged per-image keypoint counts are baked into the trace
    # (recompiles if K_b changes); pad/mask upstream if that matters.
    vals = []
    for b, tgt in enumerate(targets):
        coords = jnp.asarray(tgt['coordinates'], dtype=jnp.int32)   # (Kb, 2)
        if C == 1:
            ch = jnp.zeros((coords.shape[0],), dtype=jnp.int32)
        else:
            labels = jnp.asarray(tgt['labels'], dtype=jnp.int32)
            ch = labels - 1
        raw = predictions[b, ch, coords[:, 1], coords[:, 0]].astype(jnp.float32)
        vals.append(raw - lse[ch])
    keypoints = jnp.concatenate(vals)
    return -keypoints.mean()


# ----------------------------------------------------------------------------
# Pure-JAX reference (sanity check)
# ----------------------------------------------------------------------------
def _reference_loss(predictions, targets):
    B, C, W, H = predictions.shape
    x = jnp.transpose(predictions.astype(jnp.float32), (1, 0, 2, 3)).reshape(C, -1)
    logp = jax.nn.log_softmax(x, axis=1).reshape(C, B, W, H)
    logp = jnp.transpose(logp, (1, 0, 2, 3))                 # (B, C, W, H)
    vals = []
    for b, tgt in enumerate(targets):
        coords = jnp.asarray(tgt['coordinates'], dtype=jnp.int32)
        if C == 1:
            ch = jnp.zeros((coords.shape[0],), dtype=jnp.int32)
        else:
            ch = jnp.asarray(tgt['labels'], dtype=jnp.int32) - 1
        vals.append(logp[b, ch, coords[:, 1], coords[:, 0]])
    return -jnp.concatenate(vals).mean()


if __name__ == "__main__":
    key = jax.random.PRNGKey(0)
    B, C, W, H = 2, 4, 16, 16
    k1, k2, k3, k4, k5 = jax.random.split(key, 5)

    predictions = jax.random.normal(k1, (B, C, W, H), dtype=jnp.float32)

    # Deterministic synthetic targets: 3 keypoints for image 0, 2 for image 1.
    targets = [
        {
            'coordinates': jax.random.randint(k2, (3, 2), 0, 16, dtype=jnp.int32),
            'labels': jax.random.randint(k3, (3,), 1, C + 1, dtype=jnp.int32),
        },
        {
            'coordinates': jax.random.randint(k4, (2, 2), 0, 16, dtype=jnp.int32),
            'labels': jax.random.randint(k5, (2,), 1, C + 1, dtype=jnp.int32),
        },
    ]

    loss = maximum_likelihood_loss(predictions, targets)
    loss = jax.block_until_ready(loss)

    ref = jax.block_until_ready(_reference_loss(predictions, targets))
    assert jnp.allclose(loss, ref, atol=1e-5, rtol=1e-5), (loss, ref)

    print("KERNEL_OK")
</pallas_src>

<mosaic_0001>
module attributes {stable_mosaic.version = 11 : i64} {
  func.func @_row_lse_kernel(%arg0: i32, %arg1: i32, %arg2: memref<8x256xf32, #tpu.memory_space<vmem>>, %arg3: memref<8x1xf32, #tpu.memory_space<vmem>>, %arg4: memref<8x1xf32, #tpu.memory_space<vmem>>, %arg5: memref<8x1xf32, #tpu.memory_space<vmem>>) attributes {dimension_semantics = [#tpu.dimension_semantics<parallel>, #tpu.dimension_semantics<arbitrary>], iteration_bounds = array<i64: 1, 1>, scalar_prefetch = 0 : i64, scratch_operands = 2 : i64, tpu.core_type = #tpu.core_type<tc>, window_params = [{transform_indices = @transform_0, window_bounds = array<i64: 8, 256>}, {transform_indices = @transform_1, window_bounds = array<i64: 8, 1>}]} {
    %c0_i32 = arith.constant 0 : i32
    %0 = arith.cmpi eq, %arg1, %c0_i32 : i32
    %1 = arith.extui %0 : i1 to i32
    %c0_i32_0 = arith.constant 0 : i32
    %2 = arith.cmpi ne, %1, %c0_i32_0 : i32
    scf.if %2 {
      %cst_13 = arith.constant -3.40282347E+38 : f32
      %23 = vector.broadcast %cst_13 : f32 to vector<8x1xf32>
      %c0_14 = arith.constant 0 : index
      %c0_15 = arith.constant 0 : index
      %24 = vector.load %arg4[%c0_14, %c0_15] : memref<8x1xf32, #tpu.memory_space<vmem>>, vector<8x1xf32>
      tpu.vector_store %arg4[%c0_14, %c0_15], %23 {strides = array<i32>} : memref<8x1xf32, #tpu.memory_space<vmem>>, vector<8x1xf32>,
      %cst_16 = arith.constant 0.000000e+00 : f32
      %25 = vector.broadcast %cst_16 : f32 to vector<8x1xf32>
      %c0_17 = arith.constant 0 : index
      %c0_18 = arith.constant 0 : index
      %26 = vector.load %arg5[%c0_17, %c0_18] : memref<8x1xf32, #tpu.memory_space<vmem>>, vector<8x1xf32>
      tpu.vector_store %arg5[%c0_17, %c0_18], %25 {strides = array<i32>} : memref<8x1xf32, #tpu.memory_space<vmem>>, vector<8x1xf32>,
    } else {
    }
    %c0 = arith.constant 0 : index
    %c0_1 = arith.constant 0 : index
    %3 = vector.load %arg2[%c0, %c0_1] : memref<8x256xf32, #tpu.memory_space<vmem>>, vector<8x256xf32>
    %c0_2 = arith.constant 0 : index
    %c0_3 = arith.constant 0 : index
    %4 = vector.load %arg4[%c0_2, %c0_3] : memref<8x1xf32, #tpu.memory_space<vmem>>, vector<8x1xf32>
    %cst = arith.constant dense<0xFF800000> : vector<8xf32>
    %5 = vector.multi_reduction <maximumf>, %3, %cst [1] : vector<8x256xf32> to vector<8xf32>
    %6 = vector.shape_cast %5 : vector<8xf32> to vector<8x1xf32>
    %7 = arith.maximumf %4, %6 : vector<8x1xf32>
    %c0_4 = arith.constant 0 : index
    %c0_5 = arith.constant 0 : index
    %8 = vector.load %arg5[%c0_4, %c0_5] : memref<8x1xf32, #tpu.memory_space<vmem>>, vector<8x1xf32>
    %9 = arith.subf %4, %7 : vector<8x1xf32>
    %10 = math.exp %9 : vector<8x1xf32>
    %11 = arith.mulf %8, %10 : vector<8x1xf32>
    %12 = vector.broadcast %7 : vector<8x1xf32> to vector<8x256xf32>
    %13 = arith.subf %3, %12 : vector<8x256xf32>
    %14 = math.exp %13 : vector<8x256xf32>
    %cst_6 = arith.constant dense<0.000000e+00> : vector<8xf32>
    %15 = vector.multi_reduction <add>, %14, %cst_6 [1] : vector<8x256xf32> to vector<8xf32>
    %16 = vector.shape_cast %15 : vector<8xf32> to vector<8x1xf32>
    %17 = arith.addf %11, %16 : vector<8x1xf32>
    %c0_7 = arith.constant 0 : index
    %c0_8 = arith.constant 0 : index
    %18 = vector.load %arg5[%c0_7, %c0_8] : memref<8x1xf32, #tpu.memory_space<vmem>>, vector<8x1xf32>
    tpu.vector_store %arg5[%c0_7, %c0_8], %17 {strides = array<i32>} : memref<8x1xf32, #tpu.memory_space<vmem>>, vector<8x1xf32>,
    %c0_9 = arith.constant 0 : index
    %c0_10 = arith.constant 0 : index
    %19 = vector.load %arg4[%c0_9, %c0_10] : memref<8x1xf32, #tpu.memory_space<vmem>>, vector<8x1xf32>
    tpu.vector_store %arg4[%c0_9, %c0_10], %7 {strides = array<i32>} : memref<8x1xf32, #tpu.memory_space<vmem>>, vector<8x1xf32>,
    %c0_i32_11 = arith.constant 0 : i32
    %20 = arith.cmpi eq, %arg1, %c0_i32_11 : i32
    %21 = arith.extui %20 : i1 to i32
    %c0_i32_12 = arith.constant 0 : i32
    %22 = arith.cmpi ne, %21, %c0_i32_12 : i32
    scf.if %22 {
      %c0_13 = arith.constant 0 : index
      %c0_14 = arith.constant 0 : index
      %23 = vector.load %arg4[%c0_13, %c0_14] : memref<8x1xf32, #tpu.memory_space<vmem>>, vector<8x1xf32>
      %c0_15 = arith.constant 0 : index
      %c0_16 = arith.constant 0 : index
      %24 = vector.load %arg5[%c0_15, %c0_16] : memref<8x1xf32, #tpu.memory_space<vmem>>, vector<8x1xf32>
      %25 = math.log %24 : vector<8x1xf32>
      %26 = arith.addf %23, %25 : vector<8x1xf32>
      %c0_17 = arith.constant 0 : index
      %c0_18 = arith.constant 0 : index
      %27 = vector.load %arg3[%c0_17, %c0_18] : memref<8x1xf32, #tpu.memory_space<vmem>>, vector<8x1xf32>
      tpu.vector_store %arg3[%c0_17, %c0_18], %26 {strides = array<i32>} : memref<8x1xf32, #tpu.memory_space<vmem>>, vector<8x1xf32>,
    } else {
    }
    return
  }
  func.func @transform_0(%arg0: i32, %arg1: i32) -> (i32, i32) {
    %c0_i32 = arith.constant 0 : i32
    return %arg0, %arg1 : i32, i32
  }
  func.func @transform_1(%arg0: i32, %arg1: i32) -> (i32, i32) {
    %c0_i32 = arith.constant 0 : i32
    %c0_i32_0 = arith.constant 0 : i32
    return %arg0, %c0_i32 : i32, i32
  }
}

</mosaic_0001>

<llo_original>
// kernel: tpu_custom_call.1
$region0: #{tpu_custom_call.1}
  #allocation0 [shape = 'u32[]', space=smem, size = 0x4, offset = 0x4, fixed_abs, tag = 'smem constant byte address 0x4 - core index']
  #allocation1 [shape = 'u32[144,128]{1,0:T(1,128)}', space=vmem, size = 0x12000, scoped, tag = 'internal scratch']
  #allocation2 [shape = 'f32[8,1]{1,0:T(8,128)}', space=vmem, size = 0x1000, scoped, tag = 'scratch operand']
  #allocation3 [shape = 'f32[8,1]{1,0:T(8,128)}', space=vmem, size = 0x1000, scoped, tag = 'scratch operand']
  %s0 = inlined_call_operand.hbm [shape: f32[8,256], index: 0, kind: input, shape index: {}]
  %s1 = inlined_call_operand.vmem [shape: f32[8,1], index: 1, kind: output, shape index: {}]
  %s2 = sld [smem:[#allocation0]]
  $region26: #{tpu_custom_call.1} parent=0
    _
  %s4 = ssub.s32 1, %s2
  %s5 = scalar_select 0, %s4, %s2
  $region1: #{tpu_custom_call.1} parent=0
    #allocation4 [shape = 'u8[8192]{0}', space=vmem, size = 0x2000, scoped, tag = 'input window, operand 0, single buffered']
    #allocation5 [shape = 's32[1]{0}', space=sflag, size = 0x4, scoped, tag = 'scoped memory for tpu_custom_call.1']
    %6 = vsyncpa [#allocation5], 0
    // Predicated region
    $region2: #{tpu_custom_call.1} parent=1 // pred_check
      _
    $region3: #{tpu_custom_call.1} parent=1 // pred_check_branch
      %8 = sbr.rel (0) target = $region5
    $region4: #{tpu_custom_call.1} parent=1 // pred_region
      %s10 = ssub.s32 256, 256
      %11 = vsyncadd [#allocation5], %s10
      %s13 = sshll.u32 [#allocation4], 4
      %s14 = int_to_ptr.vmem [resolvable:$true] %s13
      %16 = dma.hbm_to_vmem [thread:$0]  %s0, 256, %s14, [#allocation5]
    $region5: #{tpu_custom_call.1} parent=1 // pred_fallthru
      _
    // Predicated region
    $region6: #{tpu_custom_call.1} parent=1 // pred_check
      _
    $region7: #{tpu_custom_call.1} parent=1 // pred_check_branch
      %18 = sbr.rel (0) target = $region9
    $region8: #{tpu_custom_call.1} parent=1 // pred_region
      %19 = dma.done [#allocation5], 256
    $region9: #{tpu_custom_call.1} parent=1 // pred_fallthru
      _
    %p20 = scmp.eq.s32.totalorder 0, 0
    // Predicated region
    $region10: #{tpu_custom_call.1} parent=1 // pred_check
      %p21 = pneg %p20
    $region11: #{tpu_custom_call.1} parent=1 // pred_check_branch
      %23 = sbr.rel (%p21) target = $region13
    $region12: #{tpu_custom_call.1} parent=1 // pred_region
      %vm24 = vcmask 7168
      %25 = vst.msk [vmem:[#allocation2] sm:$0xff] %vm24, -3.4028235e+38
      %26 = vst.msk [vmem:[#allocation3] sm:$0xff] %vm24, 0.0
    $region13: #{tpu_custom_call.1} parent=1 // pred_fallthru
      _
    %v27 = vld [vmem:[#allocation4] sm:$0xff]
    %v28 = vld [vmem:[#allocation4 + $0x8] sm:$0xff]
    %v29 = vld [vmem:[#allocation2] sm:$0xff]
    %v30 = vmax.f32 %v27, %v28
    %31 = vmax.xlane.f32.xlu0 %v30
    %v32 = vpop.xlane.xlu0 %31
    %v33 = vmax.f32 %v29, %v32
    %v34 = vld [vmem:[#allocation3] sm:$0xff]
    %v35 = vsub.f32 %v29, %v33
    %v36 = vmul.f32 %v35, 1.442695
    %v37 = vpow.pop %v36
    %v38 = vmul.f32 %v34, %v37
    %40 = vset.pattern.permute.xlu0 0
    %41 = vperm.xlu0 %40, %v33
    %v42 = vpop.permute.xlu0 %41
    %v44 = vsub.f32 %v27, %v42
    %v45 = vsub.f32 %v28, %v42
    %v46 = vmul.f32 %v44, 1.442695
    %v47 = vpow.pop %v46
    %v48 = vmul.f32 %v45, 1.442695
    %v49 = vpow.pop %v48
    %v50 = vadd.f32 %v47, %v49
    %51 = vadd.xlane.f32.xlu0 %v50
    %v52 = vpop.xlane.xlu0 %51
    %v53 = vadd.f32 %v38, %v52
    %vm54 = vcmask 7168
    %55 = vst.msk [vmem:[#allocation3] sm:$0xff] %vm54, %v53
    %56 = vst.msk [vmem:[#allocation2] sm:$0xff] %vm54, %v33
    // Predicated region
    $region14: #{tpu_custom_call.1} parent=1 // pred_check
      %p57 = pneg %p20
    $region15: #{tpu_custom_call.1} parent=1 // pred_check_branch
      %59 = sbr.rel (%p57) target = $region17
    $region16: #{tpu_custom_call.1} parent=1 // pred_region
      %v60 = vld [vmem:[#allocation2] sm:$0xff]
      %v61 = vld [vmem:[#allocation3] sm:$0xff]
      %v62 = vlog2.pop %v61
      %v63 = vmul.f32 %v62, 0.6931472
      %v64 = vadd.f32 %v60, %v63
      %65 = vst.msk [vmem:[%s1] sm:$0xff] %vm54, %v64
    $region17: #{tpu_custom_call.1} parent=1 // pred_fallthru
      _
    // Predicated region
    $region18: #{tpu_custom_call.1} parent=1 // pred_check
      _
    $region19: #{tpu_custom_call.1} parent=1 // pred_check_branch
      %67 = sbr.rel (0) target = $region21
    $region20: #{tpu_custom_call.1} parent=1 // pred_region
      _
    $region21: #{tpu_custom_call.1} parent=1 // pred_fallthru
      _
    // Predicated region
    $region22: #{tpu_custom_call.1} parent=1 // pred_check
      _
    $region23: #{tpu_custom_call.1} parent=1 // pred_check_branch
      %69 = sbr.rel (0) target = $region25
    $region24: #{tpu_custom_call.1} parent=1 // pred_region
      _
    $region25: #{tpu_custom_call.1} parent=1 // pred_fallthru
      _
    %70 = vsyncpa [#allocation5], 1

</llo_original>
